<compile_context>
chip_gen: v7x
topology: tpu7x:2x2x1
jax: 0.10.0
libtpu: 0.0.40
codegen_flags: <defaults>
</compile_context>

<pallas_src>
import functools

import jax
import jax.numpy as jnp
from jax.experimental import pallas as pl
from jax.experimental.pallas import tpu as pltpu


def _patch_merge_kernel(xe_ref, xo_ref, we_ref, wo_ref, csum_ref, bias_ref,
                        o_ref, *, eps, inv_n):
    """Fused (gathered) LayerNorm(4C) + Linear(4C -> 2C, bias-free).

    xe_ref:   (tr, Wh, 2C)  even-H rows; lanes = [x0 | x2]
    xo_ref:   (tr, Wh, 2C)  odd-H rows;  lanes = [x1 | x3]
    we_ref:   (2C, Fp)      gamma-folded weight rows for [x0; x2]
    wo_ref:   (2C, Fp)      gamma-folded weight rows for [x1; x3]
    csum_ref: (1, Fp)       column sums of gamma-folded weight (mean term)
    bias_ref: (1, Fp)       beta @ W
    o_ref:    (tr*Wh, Fp)
    """
    c2 = xe_ref.shape[-1]
    xe = xe_ref[...].reshape(-1, c2)          # (tr*Wh, 2C), native dtype
    xo = xo_ref[...].reshape(-1, c2)

    # LayerNorm statistics over the full 4C features (= both 2C slabs),
    # single pass, accumulated in f32.
    xef = xe.astype(jnp.float32)
    xof = xo.astype(jnp.float32)
    s1 = (jnp.sum(xef, axis=-1, keepdims=True)
          + jnp.sum(xof, axis=-1, keepdims=True))
    s2 = (jnp.sum(xef * xef, axis=-1, keepdims=True)
          + jnp.sum(xof * xof, axis=-1, keepdims=True))
    mean = s1 * inv_n
    var = s2 * inv_n - mean * mean
    inv = jax.lax.rsqrt(var + eps)

    # x @ (diag(gamma) @ W), accumulated in f32 on the MXU.
    acc = jnp.dot(xe, we_ref[...], preferred_element_type=jnp.float32)
    acc = acc + jnp.dot(xo, wo_ref[...], preferred_element_type=jnp.float32)

    # out = inv * (x @ Wg - mean * colsum(Wg)) + beta @ W
    out = inv * (acc - mean * csum_ref[...]) + bias_ref[...]
    o_ref[...] = out.astype(o_ref.dtype)


def _pick_row_tile(r2, wh, target_rows=1024):
    """Largest tr with tr*wh <= ~target_rows, tr | r2 and (tr*wh) % 8 == 0."""
    cap = max(1, min(r2, max(1, target_rows // max(wh, 1))))
    for t in range(cap, 0, -1):
        if r2 % t == 0 and (t * wh) % 8 == 0:
            return t
    # Rare fallback (e.g. odd W/2 with odd B*H/2): one block covering all rows
    # (block dim == full dim is always layout-legal).
    return r2


def patch_merging(x, gamma, beta, w_red, input_resolution, *, eps=1e-5,
                  target_rows=1024):
    """Forward pass of PatchMerging.

    x:      (B, H*W, C)
    gamma:  (4*C,)     LayerNorm weight
    beta:   (4*C,)     LayerNorm bias
    w_red:  (4*C, 2*C) reduction weight (transpose of the torch (2C, 4C) layout)
    returns (B, (H//2)*(W//2), 2*C)
    """
    H, W = input_resolution
    B, L, C = x.shape
    assert L == H * W, "input feature has wrong size"
    assert H % 2 == 0 and W % 2 == 0, f"x size ({H}*{W}) are not even."

    hh, wh = H // 2, W // 2
    fin, fout = 4 * C, 2 * C
    r2 = B * hh                 # merged "row groups" (one per even/odd H pair)
    rows = r2 * wh              # total merged patches

    # Free reshape (no HBM pass): axis 1 is the H-parity, last dim is
    # [even-W-col C | odd-W-col C].
    x_r = x.reshape(r2, 2, wh, 2 * C)

    # --- parameter prep (tiny, once per call) ------------------------------
    w32 = w_red.astype(jnp.float32)
    g32 = gamma.astype(jnp.float32)
    b32 = beta.astype(jnp.float32)
    wg = g32[:, None] * w32                                     # diag(gamma) @ W
    # even slab lanes = [x0 | x2] -> weight rows [0:C] and [2C:3C]
    # odd  slab lanes = [x1 | x3] -> weight rows [C:2C] and [3C:4C]
    w_even = jnp.concatenate([wg[0:C], wg[2 * C:3 * C]], axis=0)     # (2C, fout)
    w_odd = jnp.concatenate([wg[C:2 * C], wg[3 * C:4 * C]], axis=0)  # (2C, fout)
    w_colsum = jnp.sum(wg, axis=0, keepdims=True)                    # (1, fout)
    bias_row = b32[None, :] @ w32                                    # (1, fout)

    # Lane-dense output: pad fout up to a multiple of 128 with zero columns
    # (never the 4C reduction axis used for mean/var), slice back afterwards.
    fpad = (-fout) % 128
    fout_p = fout + fpad
    if fpad:
        pad2 = lambda a: jnp.pad(a, ((0, 0), (0, fpad)))
        w_even, w_odd = pad2(w_even), pad2(w_odd)
        w_colsum, bias_row = pad2(w_colsum), pad2(bias_row)

    # Feed the MXU in the activation dtype when it is bf16; else keep f32.
    mm_dtype = x.dtype if x.dtype == jnp.bfloat16 else jnp.float32
    w_even = w_even.astype(mm_dtype)
    w_odd = w_odd.astype(mm_dtype)
    w_colsum = w_colsum.astype(jnp.float32)
    bias_row = bias_row.astype(jnp.float32)

    tr = _pick_row_tile(r2, wh, target_rows)
    block_rows = tr * wh

    kernel = functools.partial(_patch_merge_kernel, eps=eps, inv_n=1.0 / fin)

    cost = pl.CostEstimate(
        flops=2 * rows * fin * fout,
        transcendentals=rows,
        bytes_accessed=rows * (fin + fout) * x.dtype.itemsize,
    )

    out = pl.pallas_call(
        kernel,
        out_shape=jax.ShapeDtypeStruct((rows, fout_p), x.dtype),
        grid_spec=pltpu.PrefetchScalarGridSpec(
            num_scalar_prefetch=0,
            grid=(r2 // tr,),
            in_specs=[
                # even-H rows: (tr, parity=0 squeezed, Wh, 2C) strided DMA
                pl.BlockSpec((tr, pl.Squeezed(), wh, 2 * C),
                             lambda i: (i, 0, 0, 0)),
                # odd-H rows
                pl.BlockSpec((tr, pl.Squeezed(), wh, 2 * C),
                             lambda i: (i, 1, 0, 0)),
                pl.BlockSpec((2 * C, fout_p), lambda i: (0, 0)),
                pl.BlockSpec((2 * C, fout_p), lambda i: (0, 0)),
                pl.BlockSpec((1, fout_p), lambda i: (0, 0)),
                pl.BlockSpec((1, fout_p), lambda i: (0, 0)),
            ],
            out_specs=pl.BlockSpec((block_rows, fout_p), lambda i: (i, 0)),
        ),
        compiler_params=pltpu.CompilerParams(
            dimension_semantics=("parallel",),
            vmem_limit_bytes=64 * 1024 * 1024,
        ),
        cost_estimate=cost,
    )(x_r, x_r, w_even, w_odd, w_colsum, bias_row)

    if fpad:
        out = out[:, :fout]
    return out.reshape(B, hh * wh, fout)


def reference(x, gamma, beta, w_red, input_resolution, eps=1e-5):
    H, W = input_resolution
    B, L, C = x.shape
    xv = x.reshape(B, H, W, C)
    x0 = xv[:, 0::2, 0::2, :]
    x1 = xv[:, 1::2, 0::2, :]
    x2 = xv[:, 0::2, 1::2, :]
    x3 = xv[:, 1::2, 1::2, :]
    xm = jnp.concatenate([x0, x1, x2, x3], axis=-1).reshape(B, -1, 4 * C)
    mean = jnp.mean(xm, axis=-1, keepdims=True)
    var = jnp.mean((xm - mean) ** 2, axis=-1, keepdims=True)
    xn = (xm - mean) * jax.lax.rsqrt(var + eps)
    y = xn * gamma + beta
    return y @ w_red


if __name__ == "__main__":
    key = jax.random.PRNGKey(0)
    B, C = 2, 4
    H, W = 16, 16
    input_resolution = (H, W)

    k_x, k_w = jax.random.split(key)
    x = jax.random.normal(k_x, (B, H * W, C), dtype=jnp.float32)

    # Deterministic parameter init (shapes from the module __init__):
    #   norm = LayerNorm(4*dim): gamma=ones, beta=zeros (torch default)
    #   reduction = Linear(4*dim, 2*dim, bias=False): weight (2C,4C) -> stored T
    gamma = jnp.ones((4 * C,), dtype=jnp.float32)
    beta = jnp.zeros((4 * C,), dtype=jnp.float32)
    w_red = jax.random.normal(k_w, (4 * C, 2 * C), dtype=jnp.float32) * 0.02

    out = patch_merging(x, gamma, beta, w_red, input_resolution)
    out = jax.block_until_ready(out)

    ref = reference(x, gamma, beta, w_red, input_resolution)
    assert out.shape == (B, (H // 2) * (W // 2), 2 * C), out.shape
    assert jnp.allclose(out, ref, atol=1e-5, rtol=1e-5), float(
        jnp.max(jnp.abs(out - ref))
    )
    print("KERNEL_OK")
</pallas_src>

<mosaic_0001>
module attributes {stable_mosaic.version = 11 : i64} {
  func.func @_patch_merge_kernel(%arg0: i32, %arg1: memref<16x1x8x8xf32, #tpu.memory_space<vmem>>, %arg2: memref<16x1x8x8xf32, #tpu.memory_space<vmem>>, %arg3: memref<8x128xf32, #tpu.memory_space<vmem>>, %arg4: memref<8x128xf32, #tpu.memory_space<vmem>>, %arg5: memref<1x128xf32, #tpu.memory_space<vmem>>, %arg6: memref<1x128xf32, #tpu.memory_space<vmem>>, %arg7: memref<128x128xf32, #tpu.memory_space<vmem>>) attributes {dimension_semantics = [#tpu.dimension_semantics<parallel>], iteration_bounds = array<i64: 1>, scalar_prefetch = 0 : i64, scratch_operands = 0 : i64, tpu.core_type = #tpu.core_type<tc>, window_params = [{transform_indices = @transform_0, window_bounds = array<i64: 16, 1, 8, 8>}, {transform_indices = @transform_1, window_bounds = array<i64: 16, 1, 8, 8>}, {pipeline_mode = #tpu.pipeline_mode<synchronous>, transform_indices = @transform_2, window_bounds = array<i64: 8, 128>}, {pipeline_mode = #tpu.pipeline_mode<synchronous>, transform_indices = @transform_3, window_bounds = array<i64: 8, 128>}, {pipeline_mode = #tpu.pipeline_mode<synchronous>, transform_indices = @transform_4, window_bounds = array<i64: 1, 128>}, {pipeline_mode = #tpu.pipeline_mode<synchronous>, transform_indices = @transform_5, window_bounds = array<i64: 1, 128>}, {transform_indices = @transform_6, window_bounds = array<i64: 128, 128>}]} {
    %c0 = arith.constant 0 : index
    %c0_0 = arith.constant 0 : index
    %c0_1 = arith.constant 0 : index
    %c0_2 = arith.constant 0 : index
    %0 = vector.load %arg1[%c0, %c0_0, %c0_1, %c0_2] : memref<16x1x8x8xf32, #tpu.memory_space<vmem>>, vector<16x1x8x8xf32>
    %1 = vector.shape_cast %0 : vector<16x1x8x8xf32> to vector<16x8x8xf32>
    %2 = vector.shape_cast %1 : vector<16x8x8xf32> to vector<128x8xf32>
    %c0_3 = arith.constant 0 : index
    %c0_4 = arith.constant 0 : index
    %c0_5 = arith.constant 0 : index
    %c0_6 = arith.constant 0 : index
    %3 = vector.load %arg2[%c0_3, %c0_4, %c0_5, %c0_6] : memref<16x1x8x8xf32, #tpu.memory_space<vmem>>, vector<16x1x8x8xf32>
    %4 = vector.shape_cast %3 : vector<16x1x8x8xf32> to vector<16x8x8xf32>
    %5 = vector.shape_cast %4 : vector<16x8x8xf32> to vector<128x8xf32>
    %cst = arith.constant dense<0.000000e+00> : vector<128xf32>
    %6 = vector.multi_reduction <add>, %2, %cst [1] : vector<128x8xf32> to vector<128xf32>
    %7 = vector.shape_cast %6 : vector<128xf32> to vector<128x1xf32>
    %cst_7 = arith.constant dense<0.000000e+00> : vector<128xf32>
    %8 = vector.multi_reduction <add>, %5, %cst_7 [1] : vector<128x8xf32> to vector<128xf32>
    %9 = vector.shape_cast %8 : vector<128xf32> to vector<128x1xf32>
    %10 = arith.addf %7, %9 : vector<128x1xf32>
    %11 = arith.mulf %2, %2 : vector<128x8xf32>
    %cst_8 = arith.constant dense<0.000000e+00> : vector<128xf32>
    %12 = vector.multi_reduction <add>, %11, %cst_8 [1] : vector<128x8xf32> to vector<128xf32>
    %13 = vector.shape_cast %12 : vector<128xf32> to vector<128x1xf32>
    %14 = arith.mulf %5, %5 : vector<128x8xf32>
    %cst_9 = arith.constant dense<0.000000e+00> : vector<128xf32>
    %15 = vector.multi_reduction <add>, %14, %cst_9 [1] : vector<128x8xf32> to vector<128xf32>
    %16 = vector.shape_cast %15 : vector<128xf32> to vector<128x1xf32>
    %17 = arith.addf %13, %16 : vector<128x1xf32>
    %cst_10 = arith.constant 6.250000e-02 : f32
    %18 = vector.broadcast %cst_10 : f32 to vector<128x1xf32>
    %19 = arith.mulf %10, %18 : vector<128x1xf32>
    %cst_11 = arith.constant 6.250000e-02 : f32
    %20 = vector.broadcast %cst_11 : f32 to vector<128x1xf32>
    %21 = arith.mulf %17, %20 : vector<128x1xf32>
    %22 = arith.mulf %19, %19 : vector<128x1xf32>
    %23 = arith.subf %21, %22 : vector<128x1xf32>
    %cst_12 = arith.constant 9.99999974E-6 : f32
    %24 = vector.broadcast %cst_12 : f32 to vector<128x1xf32>
    %25 = arith.addf %23, %24 : vector<128x1xf32>
    %26 = math.rsqrt %25 : vector<128x1xf32>
    %c0_13 = arith.constant 0 : index
    %c0_14 = arith.constant 0 : index
    %27 = vector.load %arg3[%c0_13, %c0_14] : memref<8x128xf32, #tpu.memory_space<vmem>>, vector<8x128xf32>
    %cst_15 = arith.constant dense<0.000000e+00> : vector<128x128xf32>
    %28 = tpu.matmul %2, %27, %cst_15 {dimension_numbers = #tpu.dot_dimension_numbers<[1], [0], [0], [1], [0, 0, 1, 1], [], []>} : vector<128x8xf32>, vector<8x128xf32>, vector<128x128xf32> -> vector<128x128xf32>
    %c0_16 = arith.constant 0 : index
    %c0_17 = arith.constant 0 : index
    %29 = vector.load %arg4[%c0_16, %c0_17] : memref<8x128xf32, #tpu.memory_space<vmem>>, vector<8x128xf32>
    %cst_18 = arith.constant dense<0.000000e+00> : vector<128x128xf32>
    %30 = tpu.matmul %5, %29, %cst_18 {dimension_numbers = #tpu.dot_dimension_numbers<[1], [0], [0], [1], [0, 0, 1, 1], [], []>} : vector<128x8xf32>, vector<8x128xf32>, vector<128x128xf32> -> vector<128x128xf32>
    %31 = arith.addf %28, %30 : vector<128x128xf32>
    %c0_19 = arith.constant 0 : index
    %c0_20 = arith.constant 0 : index
    %32 = vector.load %arg5[%c0_19, %c0_20] : memref<1x128xf32, #tpu.memory_space<vmem>>, vector<1x128xf32>
    %33 = vector.broadcast %19 : vector<128x1xf32> to vector<128x128xf32>
    %34 = vector.broadcast %32 : vector<1x128xf32> to vector<128x128xf32>
    %35 = arith.mulf %33, %34 : vector<128x128xf32>
    %36 = arith.subf %31, %35 : vector<128x128xf32>
    %37 = vector.broadcast %26 : vector<128x1xf32> to vector<128x128xf32>
    %38 = arith.mulf %37, %36 : vector<128x128xf32>
    %c0_21 = arith.constant 0 : index
    %c0_22 = arith.constant 0 : index
    %39 = vector.load %arg6[%c0_21, %c0_22] : memref<1x128xf32, #tpu.memory_space<vmem>>, vector<1x128xf32>
    %40 = vector.broadcast %39 : vector<1x128xf32> to vector<128x128xf32>
    %41 = arith.addf %38, %40 : vector<128x128xf32>
    %c0_23 = arith.constant 0 : index
    %c0_24 = arith.constant 0 : index
    %42 = vector.load %arg7[%c0_23, %c0_24] : memref<128x128xf32, #tpu.memory_space<vmem>>, vector<128x128xf32>
    tpu.vector_store %arg7[%c0_23, %c0_24], %41 {strides = array<i32>} : memref<128x128xf32, #tpu.memory_space<vmem>>, vector<128x128xf32>,
    return
  }
  func.func @transform_0(%arg0: i32) -> (i32, i32, i32, i32) {
    %c0_i32 = arith.constant 0 : i32
    %c0_i32_0 = arith.constant 0 : i32
    %c0_i32_1 = arith.constant 0 : i32
    %c0_i32_2 = arith.constant 0 : i32
    return %arg0, %c0_i32, %c0_i32_0, %c0_i32_1 : i32, i32, i32, i32
  }
  func.func @transform_1(%arg0: i32) -> (i32, i32, i32, i32) {
    %c1_i32 = arith.constant 1 : i32
    %c0_i32 = arith.constant 0 : i32
    %c0_i32_0 = arith.constant 0 : i32
    %c0_i32_1 = arith.constant 0 : i32
    return %arg0, %c1_i32, %c0_i32, %c0_i32_0 : i32, i32, i32, i32
  }
  func.func @transform_2(%arg0: i32) -> (i32, i32) {
    %c0_i32 = arith.constant 0 : i32
    %c0_i32_0 = arith.constant 0 : i32
    %c0_i32_1 = arith.constant 0 : i32
    return %c0_i32, %c0_i32_0 : i32, i32
  }
  func.func @transform_3(%arg0: i32) -> (i32, i32) {
    %c0_i32 = arith.constant 0 : i32
    %c0_i32_0 = arith.constant 0 : i32
    %c0_i32_1 = arith.constant 0 : i32
    return %c0_i32, %c0_i32_0 : i32, i32
  }
  func.func @transform_4(%arg0: i32) -> (i32, i32) {
    %c0_i32 = arith.constant 0 : i32
    %c0_i32_0 = arith.constant 0 : i32
    %c0_i32_1 = arith.constant 0 : i32
    return %c0_i32, %c0_i32_0 : i32, i32
  }
  func.func @transform_5(%arg0: i32) -> (i32, i32) {
    %c0_i32 = arith.constant 0 : i32
    %c0_i32_0 = arith.constant 0 : i32
    %c0_i32_1 = arith.constant 0 : i32
    return %c0_i32, %c0_i32_0 : i32, i32
  }
  func.func @transform_6(%arg0: i32) -> (i32, i32) {
    %c0_i32 = arith.constant 0 : i32
    %c0_i32_0 = arith.constant 0 : i32
    return %arg0, %c0_i32 : i32, i32
  }
}

</mosaic_0001>

<llo_original>
// kernel: tpu_custom_call.1
$region0: #{tpu_custom_call.1}
  #allocation0 [shape = 'u32[]', space=smem, size = 0x4, offset = 0x4, fixed_abs, tag = 'smem constant byte address 0x4 - core index']
  #allocation1 [shape = 'u32[144,128]{1,0:T(1,128)}', space=vmem, size = 0x12000, scoped, tag = 'internal scratch']
  %s0 = inlined_call_operand.hbm [shape: f32[16,2,8,8], index: 0, kind: input, shape index: {}]
  %s1 = inlined_call_operand.hbm [shape: f32[16,2,8,8], index: 1, kind: input, shape index: {}]
  %s2 = inlined_call_operand.hbm [shape: f32[8,128], index: 2, kind: input, shape index: {}]
  %s3 = inlined_call_operand.hbm [shape: f32[8,128], index: 3, kind: input, shape index: {}]
  %s4 = inlined_call_operand.hbm [shape: f32[1,128], index: 4, kind: input, shape index: {}]
  %s5 = inlined_call_operand.hbm [shape: f32[1,128], index: 5, kind: input, shape index: {}]
  %s6 = inlined_call_operand.hbm [shape: f32[128,128], index: 6, kind: output, shape index: {}]
  %s7 = sld [smem:[#allocation0]]
  $region58: #{tpu_custom_call.1} parent=0
    _
  %s9 = ssub.s32 1, %s7
  %s10 = scalar_select 0, %s9, %s7
  $region1: #{tpu_custom_call.1} parent=0
    #allocation2 [shape = 'u8[65536]{0}', space=vmem, size = 0x10000, scoped, tag = 'input window, operand 0, single buffered']
    #allocation3 [shape = 's32[1]{0}', space=sflag, size = 0x4, scoped, tag = 'scoped memory for tpu_custom_call.1']
    #allocation4 [shape = 's32[1]{0}', space=sflag, size = 0x4, scoped, tag = 'scoped memory for tpu_custom_call.1']
    #allocation5 [shape = 'u8[65536]{0}', space=vmem, size = 0x10000, scoped, tag = 'input window, operand 1, single buffered']
    #allocation6 [shape = 's32[1]{0}', space=sflag, size = 0x4, scoped, tag = 'scoped memory for tpu_custom_call.1']
    #allocation7 [shape = 'u8[4096]{0}', space=vmem, size = 0x1000, scoped, tag = 'input window, operand 2, single buffered']
    #allocation8 [shape = 'u8[4096]{0}', space=vmem, size = 0x1000, scoped, tag = 'input window, operand 3, single buffered']
    #allocation9 [shape = 's32[1]{0}', space=sflag, size = 0x4, scoped, tag = 'scoped memory for tpu_custom_call.1']
    #allocation10 [shape = 'u8[512]{0}', space=vmem, size = 0x400, scoped, tag = 'input window, operand 4, single buffered']
    #allocation11 [shape = 'u8[512]{0}', space=vmem, size = 0x400, scoped, tag = 'input window, operand 5, single buffered']
    #allocation12 [shape = 's32[1]{0}', space=sflag, size = 0x4, scoped, tag = 'scoped memory for tpu_custom_call.1']
    #allocation13 [shape = 'u8[65536]{0}', space=vmem, size = 0x10000, scoped, tag = 'output window, operand 0, single buffered']
    %11 = vsyncpa [#allocation3], 0
    %12 = vsyncpa [#allocation6], 0
    %13 = vsyncpa [#allocation9], 0
    %14 = vsyncpa [#allocation12], 0
    %15 = vsyncpa [#allocation4], 0
    // Predicated region
    $region2: #{tpu_custom_call.1} parent=1 // pred_check
      _
    $region3: #{tpu_custom_call.1} parent=1 // pred_check_branch
      %17 = sbr.rel (0) target = $region5
    $region4: #{tpu_custom_call.1} parent=1 // pred_region
      %s19 = ssub.s32 2048, 2048
      %20 = vsyncadd [#allocation3], %s19
      %s21 = sshll.u32 [#allocation2], 4
      %s22 = int_to_ptr.vmem [resolvable:$true] %s21
      %27 = dma.hbm_to_vmem [thread:$0]  %s0, 2048, %s22, [#allocation3], 256, 128, 8
    $region5: #{tpu_custom_call.1} parent=1 // pred_fallthru
      _
    // Predicated region
    $region6: #{tpu_custom_call.1} parent=1 // pred_check
      _
    $region7: #{tpu_custom_call.1} parent=1 // pred_check_branch
      %29 = sbr.rel (0) target = $region9
    $region8: #{tpu_custom_call.1} parent=1 // pred_region
      %s31 = ssub.s32 2048, 2048
      %32 = vsyncadd [#allocation6], %s31
      %s33 = scalar_lea.hbm %s1, 128
      %s34 = sshll.u32 [#allocation5], 4
      %s35 = int_to_ptr.vmem [resolvable:$true] %s34
      %40 = dma.hbm_to_vmem [thread:$0]  %s33, 2048, %s35, [#allocation6], 256, 128, 8
    $region9: #{tpu_custom_call.1} parent=1 // pred_fallthru
      _
    // Predicated region
    $region10: #{tpu_custom_call.1} parent=1 // pred_check
      _
    $region11: #{tpu_custom_call.1} parent=1 // pred_check_branch
      %42 = sbr.rel (0) target = $region13
    $region12: #{tpu_custom_call.1} parent=1 // pred_region
      %s44 = ssub.s32 128, 128
      %45 = vsyncadd [#allocation6], %s44
      %s47 = sshll.u32 [#allocation7], 4
      %s48 = int_to_ptr.vmem [resolvable:$true] %s47
      %50 = dma.hbm_to_vmem [thread:$0]  %s2, 128, %s48, [#allocation6]
    $region13: #{tpu_custom_call.1} parent=1 // pred_fallthru
      _
    // Predicated region
    $region14: #{tpu_custom_call.1} parent=1 // pred_check
      _
    $region15: #{tpu_custom_call.1} parent=1 // pred_check_branch
      %52 = sbr.rel (0) target = $region17
    $region16: #{tpu_custom_call.1} parent=1 // pred_region
      %s54 = ssub.s32 128, 128
      %55 = vsyncadd [#allocation9], %s54
      %s57 = sshll.u32 [#allocation8], 4
      %s58 = int_to_ptr.vmem [resolvable:$true] %s57
      %60 = dma.hbm_to_vmem [thread:$0]  %s3, 128, %s58, [#allocation9]
    $region17: #{tpu_custom_call.1} parent=1 // pred_fallthru
      _
    // Predicated region
    $region18: #{tpu_custom_call.1} parent=1 // pred_check
      _
    $region19: #{tpu_custom_call.1} parent=1 // pred_check_branch
      %62 = sbr.rel (0) target = $region21
    $region20: #{tpu_custom_call.1} parent=1 // pred_region
      %s64 = ssub.s32 16, 16
      %65 = vsyncadd [#allocation9], %s64
      %s67 = sshll.u32 [#allocation10], 4
      %s68 = int_to_ptr.vmem [resolvable:$true] %s67
      %70 = dma.hbm_to_vmem [thread:$0]  %s4, 16, %s68, [#allocation9]
    $region21: #{tpu_custom_call.1} parent=1 // pred_fallthru
      _
    // Predicated region
    $region22: #{tpu_custom_call.1} parent=1 // pred_check
      _
    $region23: #{tpu_custom_call.1} parent=1 // pred_check_branch
      %72 = sbr.rel (0) target = $region25
    $region24: #{tpu_custom_call.1} parent=1 // pred_region
      %s74 = ssub.s32 16, 16
      %75 = vsyncadd [#allocation12], %s74
      %s77 = sshll.u32 [#allocation11], 4
      %s78 = int_to_ptr.vmem [resolvable:$true] %s77
      %80 = dma.hbm_to_vmem [thread:$0]  %s5, 16, %s78, [#allocation12]
    $region25: #{tpu_custom_call.1} parent=1 // pred_fallthru
      _
    // Predicated region
    $region26: #{tpu_custom_call.1} parent=1 // pred_check
      _
    $region27: #{tpu_custom_call.1} parent=1 // pred_check_branch
      %82 = sbr.rel (0) target = $region29
    $region28: #{tpu_custom_call.1} parent=1 // pred_region
      %83 = dma.done [#allocation3], 2048
    $region29: #{tpu_custom_call.1} parent=1 // pred_fallthru
      _
    // Predicated region
    $region30: #{tpu_custom_call.1} parent=1 // pred_check
      _
    $region31: #{tpu_custom_call.1} parent=1 // pred_check_branch
      %85 = sbr.rel (0) target = $region33
    $region32: #{tpu_custom_call.1} parent=1 // pred_region
      %86 = dma.done [#allocation6], 2048
    $region33: #{tpu_custom_call.1} parent=1 // pred_fallthru
      _
    // Predicated region
    $region34: #{tpu_custom_call.1} parent=1 // pred_check
      _
    $region35: #{tpu_custom_call.1} parent=1 // pred_check_branch
      %88 = sbr.rel (0) target = $region37
    $region36: #{tpu_custom_call.1} parent=1 // pred_region
      %89 = dma.done [#allocation6], 128
    $region37: #{tpu_custom_call.1} parent=1 // pred_fallthru
      _
    // Predicated region
    $region38: #{tpu_custom_call.1} parent=1 // pred_check
      _
    $region39: #{tpu_custom_call.1} parent=1 // pred_check_branch
      %91 = sbr.rel (0) target = $region41
    $region40: #{tpu_custom_call.1} parent=1 // pred_region
      %92 = dma.done [#allocation9], 128
    $region41: #{tpu_custom_call.1} parent=1 // pred_fallthru
      _
    // Predicated region
    $region42: #{tpu_custom_call.1} parent=1 // pred_check
      _
    $region43: #{tpu_custom_call.1} parent=1 // pred_check_branch
      %94 = sbr.rel (0) target = $region45
    $region44: #{tpu_custom_call.1} parent=1 // pred_region
      %95 = dma.done [#allocation9], 16
    $region45: #{tpu_custom_call.1} parent=1 // pred_fallthru
      _
    // Predicated region
    $region46: #{tpu_custom_call.1} parent=1 // pred_check
      _
    $region47: #{tpu_custom_call.1} parent=1 // pred_check_branch
      %97 = sbr.rel (0) target = $region49
    $region48: #{tpu_custom_call.1} parent=1 // pred_region
      %98 = dma.done [#allocation12], 16
    $region49: #{tpu_custom_call.1} parent=1 // pred_fallthru
      _
    %v99 = vld [vmem:[#allocation2] sm:$0xff]
    %v100 = vld [vmem:[#allocation2 + $0x8] sm:$0xff]
    %v101 = vld [vmem:[#allocation2 + $0x10] sm:$0xff]
    %v102 = vld [vmem:[#allocation2 + $0x18] sm:$0xff]
    %v103 = vld [vmem:[#allocation2 + $0x20] sm:$0xff]
    %v104 = vld [vmem:[#allocation2 + $0x28] sm:$0xff]
    %v105 = vld [vmem:[#allocation2 + $0x30] sm:$0xff]
    %v106 = vld [vmem:[#allocation2 + $0x38] sm:$0xff]
    %v107 = vld [vmem:[#allocation2 + $0x40] sm:$0xff]
    %v108 = vld [vmem:[#allocation2 + $0x48] sm:$0xff]
    %v109 = vld [vmem:[#allocation2 + $0x50] sm:$0xff]
    %v110 = vld [vmem:[#allocation2 + $0x58] sm:$0xff]
    %v111 = vld [vmem:[#allocation2 + $0x60] sm:$0xff]
    %v112 = vld [vmem:[#allocation2 + $0x68] sm:$0xff]
    %v113 = vld [vmem:[#allocation2 + $0x70] sm:$0xff]
    %v114 = vld [vmem:[#allocation2 + $0x78] sm:$0xff]
    %v115 = vld [vmem:[#allocation5] sm:$0xff]
    %v116 = vld [vmem:[#allocation5 + $0x8] sm:$0xff]
    %v117 = vld [vmem:[#allocation5 + $0x10] sm:$0xff]
    %v118 = vld [vmem:[#allocation5 + $0x18] sm:$0xff]
    %v119 = vld [vmem:[#allocation5 + $0x20] sm:$0xff]
    %v120 = vld [vmem:[#allocation5 + $0x28] sm:$0xff]
    %v121 = vld [vmem:[#allocation5 + $0x30] sm:$0xff]
    %v122 = vld [vmem:[#allocation5 + $0x38] sm:$0xff]
    %v123 = vld [vmem:[#allocation5 + $0x40] sm:$0xff]
    %v124 = vld [vmem:[#allocation5 + $0x48] sm:$0xff]
    %v125 = vld [vmem:[#allocation5 + $0x50] sm:$0xff]
    %v126 = vld [vmem:[#allocation5 + $0x58] sm:$0xff]
    %v127 = vld [vmem:[#allocation5 + $0x60] sm:$0xff]
    %v128 = vld [vmem:[#allocation5 + $0x68] sm:$0xff]
    %v129 = vld [vmem:[#allocation5 + $0x70] sm:$0xff]
    %v130 = vld [vmem:[#allocation5 + $0x78] sm:$0xff]
    %vm131 = vcmask 64512
    %v132 = vsel %vm131, %v99, 0.0
    %133 = vadd.xlane.f32.xlu0 %v132
    %v134 = vpop.xlane.xlu0 %133
    %v135 = vsel %vm131, %v100, 0.0
    %136 = vadd.xlane.f32.xlu0 %v135
    %v137 = vpop.xlane.xlu0 %136
    %v138 = vsel %vm131, %v101, 0.0
    %139 = vadd.xlane.f32.xlu0 %v138
    %v140 = vpop.xlane.xlu0 %139
    %v141 = vsel %vm131, %v102, 0.0
    %142 = vadd.xlane.f32.xlu0 %v141
    %v143 = vpop.xlane.xlu0 %142
    %v144 = vsel %vm131, %v103, 0.0
    %145 = vadd.xlane.f32.xlu0 %v144
    %v146 = vpop.xlane.xlu0 %145
    %v147 = vsel %vm131, %v104, 0.0
    %148 = vadd.xlane.f32.xlu0 %v147
    %v149 = vpop.xlane.xlu0 %148
    %v150 = vsel %vm131, %v105, 0.0
    %151 = vadd.xlane.f32.xlu0 %v150
    %v152 = vpop.xlane.xlu0 %151
    %v153 = vsel %vm131, %v106, 0.0
    %154 = vadd.xlane.f32.xlu0 %v153
    %v155 = vpop.xlane.xlu0 %154
    %v156 = vsel %vm131, %v107, 0.0
    %157 = vadd.xlane.f32.xlu0 %v156
    %v158 = vpop.xlane.xlu0 %157
    %v159 = vsel %vm131, %v108, 0.0
    %160 = vadd.xlane.f32.xlu0 %v159
    %v161 = vpop.xlane.xlu0 %160
    %v162 = vsel %vm131, %v109, 0.0
    %163 = vadd.xlane.f32.xlu0 %v162
    %v164 = vpop.xlane.xlu0 %163
    %v165 = vsel %vm131, %v110, 0.0
    %166 = vadd.xlane.f32.xlu0 %v165
    %v167 = vpop.xlane.xlu0 %166
    %v168 = vsel %vm131, %v111, 0.0
    %169 = vadd.xlane.f32.xlu0 %v168
    %v170 = vpop.xlane.xlu0 %169
    %v171 = vsel %vm131, %v112, 0.0
    %172 = vadd.xlane.f32.xlu0 %v171
    %v173 = vpop.xlane.xlu0 %172
    %v174 = vsel %vm131, %v113, 0.0
    %175 = vadd.xlane.f32.xlu0 %v174
    %v176 = vpop.xlane.xlu0 %175
    %v177 = vsel %vm131, %v114, 0.0
    %178 = vadd.xlane.f32.xlu0 %v177
    %v179 = vpop.xlane.xlu0 %178
    %v180 = vsel %vm131, %v115, 0.0
    %181 = vadd.xlane.f32.xlu0 %v180
    %v182 = vpop.xlane.xlu0 %181
    %v183 = vsel %vm131, %v116, 0.0
    %184 = vadd.xlane.f32.xlu0 %v183
    %v185 = vpop.xlane.xlu0 %184
    %v186 = vsel %vm131, %v117, 0.0
    %187 = vadd.xlane.f32.xlu0 %v186
    %v188 = vpop.xlane.xlu0 %187
    %v189 = vsel %vm131, %v118, 0.0
    %190 = vadd.xlane.f32.xlu0 %v189
    %v191 = vpop.xlane.xlu0 %190
    %v192 = vsel %vm131, %v119, 0.0
    %193 = vadd.xlane.f32.xlu0 %v192
    %v194 = vpop.xlane.xlu0 %193
    %v195 = vsel %vm131, %v120, 0.0
    %196 = vadd.xlane.f32.xlu0 %v195
    %v197 = vpop.xlane.xlu0 %196
    %v198 = vsel %vm131, %v121, 0.0
    %199 = vadd.xlane.f32.xlu0 %v198
    %v200 = vpop.xlane.xlu0 %199
    %v201 = vsel %vm131, %v122, 0.0
    %202 = vadd.xlane.f32.xlu0 %v201
    %v203 = vpop.xlane.xlu0 %202
    %v204 = vsel %vm131, %v123, 0.0
    %205 = vadd.xlane.f32.xlu0 %v204
    %v206 = vpop.xlane.xlu0 %205
    %v207 = vsel %vm131, %v124, 0.0
    %208 = vadd.xlane.f32.xlu0 %v207
    %v209 = vpop.xlane.xlu0 %208
    %v210 = vsel %vm131, %v125, 0.0
    %211 = vadd.xlane.f32.xlu0 %v210
    %v212 = vpop.xlane.xlu0 %211
    %v213 = vsel %vm131, %v126, 0.0
    %214 = vadd.xlane.f32.xlu0 %v213
    %v215 = vpop.xlane.xlu0 %214
    %v216 = vsel %vm131, %v127, 0.0
    %217 = vadd.xlane.f32.xlu0 %v216
    %v218 = vpop.xlane.xlu0 %217
    %v219 = vsel %vm131, %v128, 0.0
    %220 = vadd.xlane.f32.xlu0 %v219
    %v221 = vpop.xlane.xlu0 %220
    %v222 = vsel %vm131, %v129, 0.0
    %223 = vadd.xlane.f32.xlu0 %v222
    %v224 = vpop.xlane.xlu0 %223
    %v225 = vsel %vm131, %v130, 0.0
    %226 = vadd.xlane.f32.xlu0 %v225
    %v227 = vpop.xlane.xlu0 %226
    %v228 = vadd.f32 %v134, %v182
    %v229 = vadd.f32 %v137, %v185
    %v230 = vadd.f32 %v140, %v188
    %v231 = vadd.f32 %v143, %v191
    %v232 = vadd.f32 %v146, %v194
    %v233 = vadd.f32 %v149, %v197
    %v234 = vadd.f32 %v152, %v200
    %v235 = vadd.f32 %v155, %v203
    %v236 = vadd.f32 %v158, %v206
    %v237 = vadd.f32 %v161, %v209
    %v238 = vadd.f32 %v164, %v212
    %v239 = vadd.f32 %v167, %v215
    %v240 = vadd.f32 %v170, %v218
    %v241 = vadd.f32 %v173, %v221
    %v242 = vadd.f32 %v176, %v224
    %v243 = vadd.f32 %v179, %v227
    %v244 = vmul.f32 %v99, %v99
    %v245 = vmul.f32 %v100, %v100
    %v246 = vmul.f32 %v101, %v101
    %v247 = vmul.f32 %v102, %v102
    %v248 = vmul.f32 %v103, %v103
    %v249 = vmul.f32 %v104, %v104
    %v250 = vmul.f32 %v105, %v105
    %v251 = vmul.f32 %v106, %v106
    %v252 = vmul.f32 %v107, %v107
    %v253 = vmul.f32 %v108, %v108
    %v254 = vmul.f32 %v109, %v109
    %v255 = vmul.f32 %v110, %v110
    %v256 = vmul.f32 %v111, %v111
    %v257 = vmul.f32 %v112, %v112
    %v258 = vmul.f32 %v113, %v113
    %v259 = vmul.f32 %v114, %v114
    %v260 = vsel %vm131, %v244, 0.0
    %261 = vadd.xlane.f32.xlu0 %v260
    %v262 = vpop.xlane.xlu0 %261
    %v263 = vsel %vm131, %v245, 0.0
    %264 = vadd.xlane.f32.xlu0 %v263
    %v265 = vpop.xlane.xlu0 %264
    %v266 = vsel %vm131, %v246, 0.0
    %267 = vadd.xlane.f32.xlu0 %v266
    %v268 = vpop.xlane.xlu0 %267
    %v269 = vsel %vm131, %v247, 0.0
    %270 = vadd.xlane.f32.xlu0 %v269
    %v271 = vpop.xlane.xlu0 %270
    %v272 = vsel %vm131, %v248, 0.0
    %273 = vadd.xlane.f32.xlu0 %v272
    %v274 = vpop.xlane.xlu0 %273
    %v275 = vsel %vm131, %v249, 0.0
    %276 = vadd.xlane.f32.xlu0 %v275
    %v277 = vpop.xlane.xlu0 %276
    %v278 = vsel %vm131, %v250, 0.0
    %279 = vadd.xlane.f32.xlu0 %v278
    %v280 = vpop.xlane.xlu0 %279
    %v281 = vsel %vm131, %v251, 0.0
    %282 = vadd.xlane.f32.xlu0 %v281
    %v283 = vpop.xlane.xlu0 %282
    %v284 = vsel %vm131, %v252, 0.0
    %285 = vadd.xlane.f32.xlu0 %v284
    %v286 = vpop.xlane.xlu0 %285
    %v287 = vsel %vm131, %v253, 0.0
    %288 = vadd.xlane.f32.xlu0 %v287
    %v289 = vpop.xlane.xlu0 %288
    %v290 = vsel %vm131, %v254, 0.0
    %291 = vadd.xlane.f32.xlu0 %v290
    %v292 = vpop.xlane.xlu0 %291
    %v293 = vsel %vm131, %v255, 0.0
    %294 = vadd.xlane.f32.xlu0 %v293
    %v295 = vpop.xlane.xlu0 %294
    %v296 = vsel %vm131, %v256, 0.0
    %297 = vadd.xlane.f32.xlu0 %v296
    %v298 = vpop.xlane.xlu0 %297
    %v299 = vsel %vm131, %v257, 0.0
    %300 = vadd.xlane.f32.xlu0 %v299
    %v301 = vpop.xlane.xlu0 %300
    %v302 = vsel %vm131, %v258, 0.0
    %303 = vadd.xlane.f32.xlu0 %v302
    %v304 = vpop.xlane.xlu0 %303
    %v305 = vsel %vm131, %v259, 0.0
    %306 = vadd.xlane.f32.xlu0 %v305
    %v307 = vpop.xlane.xlu0 %306
    %v308 = vmul.f32 %v115, %v115
    %v309 = vmul.f32 %v116, %v116
    %v310 = vmul.f32 %v117, %v117
    %v311 = vmul.f32 %v118, %v118
    %v312 = vmul.f32 %v119, %v119
    %v313 = vmul.f32 %v120, %v120
    %v314 = vmul.f32 %v121, %v121
    %v315 = vmul.f32 %v122, %v122
    %v316 = vmul.f32 %v123, %v123
    %v317 = vmul.f32 %v124, %v124
    %v318 = vmul.f32 %v125, %v125
    %v319 = vmul.f32 %v126, %v126
    %v320 = vmul.f32 %v127, %v127
    %v321 = vmul.f32 %v128, %v128
    %v322 = vmul.f32 %v129, %v129
    %v323 = vmul.f32 %v130, %v130
    %v324 = vsel %vm131, %v308, 0.0
    %325 = vadd.xlane.f32.xlu0 %v324
    %v326 = vpop.xlane.xlu0 %325
    %v327 = vsel %vm131, %v309, 0.0
    %328 = vadd.xlane.f32.xlu0 %v327
    %v329 = vpop.xlane.xlu0 %328
    %v330 = vsel %vm131, %v310, 0.0
    %331 = vadd.xlane.f32.xlu0 %v330
    %v332 = vpop.xlane.xlu0 %331
    %v333 = vsel %vm131, %v311, 0.0
    %334 = vadd.xlane.f32.xlu0 %v333
    %v335 = vpop.xlane.xlu0 %334
    %v336 = vsel %vm131, %v312, 0.0
    %337 = vadd.xlane.f32.xlu0 %v336
    %v338 = vpop.xlane.xlu0 %337
    %v339 = vsel %vm131, %v313, 0.0
    %340 = vadd.xlane.f32.xlu0 %v339
    %v341 = vpop.xlane.xlu0 %340
    %v342 = vsel %vm131, %v314, 0.0
    %343 = vadd.xlane.f32.xlu0 %v342
    %v344 = vpop.xlane.xlu0 %343
    %v345 = vsel %vm131, %v315, 0.0
    %346 = vadd.xlane.f32.xlu0 %v345
    %v347 = vpop.xlane.xlu0 %346
    %v348 = vsel %vm131, %v316, 0.0
    %349 = vadd.xlane.f32.xlu0 %v348
    %v350 = vpop.xlane.xlu0 %349
    %v351 = vsel %vm131, %v317, 0.0
    %352 = vadd.xlane.f32.xlu0 %v351
    %v353 = vpop.xlane.xlu0 %352
    %v354 = vsel %vm131, %v318, 0.0
    %355 = vadd.xlane.f32.xlu0 %v354
    %v356 = vpop.xlane.xlu0 %355
    %v357 = vsel %vm131, %v319, 0.0
    %358 = vadd.xlane.f32.xlu0 %v357
    %v359 = vpop.xlane.xlu0 %358
    %v360 = vsel %vm131, %v320, 0.0
    %361 = vadd.xlane.f32.xlu0 %v360
    %v362 = vpop.xlane.xlu0 %361
    %v363 = vsel %vm131, %v321, 0.0
    %364 = vadd.xlane.f32.xlu0 %v363
    %v365 = vpop.xlane.xlu0 %364
    %v366 = vsel %vm131, %v322, 0.0
    %367 = vadd.xlane.f32.xlu0 %v366
    %v368 = vpop.xlane.xlu0 %367
    %v369 = vsel %vm131, %v323, 0.0
    %370 = vadd.xlane.f32.xlu0 %v369
    %v371 = vpop.xlane.xlu0 %370
    %v372 = vadd.f32 %v262, %v326
    %v373 = vadd.f32 %v265, %v329
    %v374 = vadd.f32 %v268, %v332
    %v375 = vadd.f32 %v271, %v335
    %v376 = vadd.f32 %v274, %v338
    %v377 = vadd.f32 %v277, %v341
    %v378 = vadd.f32 %v280, %v344
    %v379 = vadd.f32 %v283, %v347
    %v380 = vadd.f32 %v286, %v350
    %v381 = vadd.f32 %v289, %v353
    %v382 = vadd.f32 %v292, %v356
    %v383 = vadd.f32 %v295, %v359
    %v384 = vadd.f32 %v298, %v362
    %v385 = vadd.f32 %v301, %v365
    %v386 = vadd.f32 %v304, %v368
    %v387 = vadd.f32 %v307, %v371
    %v388 = vmul.f32 %v228, 0.0625
    %v389 = vmul.f32 %v229, 0.0625
    %v390 = vmul.f32 %v230, 0.0625
    %v391 = vmul.f32 %v231, 0.0625
    %v392 = vmul.f32 %v232, 0.0625
    %v393 = vmul.f32 %v233, 0.0625
    %v394 = vmul.f32 %v234, 0.0625
    %v395 = vmul.f32 %v235, 0.0625
    %v396 = vmul.f32 %v236, 0.0625
    %v397 = vmul.f32 %v237, 0.0625
    %v398 = vmul.f32 %v238, 0.0625
    %v399 = vmul.f32 %v239, 0.0625
    %v400 = vmul.f32 %v240, 0.0625
    %v401 = vmul.f32 %v241, 0.0625
    %v402 = vmul.f32 %v242, 0.0625
    %v403 = vmul.f32 %v243, 0.0625
    %v404 = vmul.f32 %v372, 0.0625
    %v405 = vmul.f32 %v373, 0.0625
    %v406 = vmul.f32 %v374, 0.0625
    %v407 = vmul.f32 %v375, 0.0625
    %v408 = vmul.f32 %v376, 0.0625
    %v409 = vmul.f32 %v377, 0.0625
    %v410 = vmul.f32 %v378, 0.0625
    %v411 = vmul.f32 %v379, 0.0625
    %v412 = vmul.f32 %v380, 0.0625
    %v413 = vmul.f32 %v381, 0.0625
    %v414 = vmul.f32 %v382, 0.0625
    %v415 = vmul.f32 %v383, 0.0625
    %v416 = vmul.f32 %v384, 0.0625
    %v417 = vmul.f32 %v385, 0.0625
    %v418 = vmul.f32 %v386, 0.0625
    %v419 = vmul.f32 %v387, 0.0625
    %v420 = vmul.f32 %v388, %v388
    %v421 = vmul.f32 %v389, %v389
    %v422 = vmul.f32 %v390, %v390
    %v423 = vmul.f32 %v391, %v391
    %v424 = vmul.f32 %v392, %v392
    %v425 = vmul.f32 %v393, %v393
    %v426 = vmul.f32 %v394, %v394
    %v427 = vmul.f32 %v395, %v395
    %v428 = vmul.f32 %v396, %v396
    %v429 = vmul.f32 %v397, %v397
    %v430 = vmul.f32 %v398, %v398
    %v431 = vmul.f32 %v399, %v399
    %v432 = vmul.f32 %v400, %v400
    %v433 = vmul.f32 %v401, %v401
    %v434 = vmul.f32 %v402, %v402
    %v435 = vmul.f32 %v403, %v403
    %v436 = vsub.f32 %v404, %v420
    %v437 = vsub.f32 %v405, %v421
    %v438 = vsub.f32 %v406, %v422
    %v439 = vsub.f32 %v407, %v423
    %v440 = vsub.f32 %v408, %v424
    %v441 = vsub.f32 %v409, %v425
    %v442 = vsub.f32 %v410, %v426
    %v443 = vsub.f32 %v411, %v427
    %v444 = vsub.f32 %v412, %v428
    %v445 = vsub.f32 %v413, %v429
    %v446 = vsub.f32 %v414, %v430
    %v447 = vsub.f32 %v415, %v431
    %v448 = vsub.f32 %v416, %v432
    %v449 = vsub.f32 %v417, %v433
    %v450 = vsub.f32 %v418, %v434
    %v451 = vsub.f32 %v419, %v435
    %v452 = vadd.f32 %v436, 1e-05
    %v453 = vadd.f32 %v437, 1e-05
    %v454 = vadd.f32 %v438, 1e-05
    %v455 = vadd.f32 %v439, 1e-05
    %v456 = vadd.f32 %v440, 1e-05
    %v457 = vadd.f32 %v441, 1e-05
    %v458 = vadd.f32 %v442, 1e-05
    %v459 = vadd.f32 %v443, 1e-05
    %v460 = vadd.f32 %v444, 1e-05
    %v461 = vadd.f32 %v445, 1e-05
    %v462 = vadd.f32 %v446, 1e-05
    %v463 = vadd.f32 %v447, 1e-05
    %v464 = vadd.f32 %v448, 1e-05
    %v465 = vadd.f32 %v449, 1e-05
    %v466 = vadd.f32 %v450, 1e-05
    %v467 = vadd.f32 %v451, 1e-05
    %v468 = vrsqrt.pop %v452
    %v469 = vrsqrt.pop %v453
    %v470 = vrsqrt.pop %v454
    %v471 = vrsqrt.pop %v455
    %v472 = vrsqrt.pop %v456
    %v473 = vrsqrt.pop %v457
    %v474 = vrsqrt.pop %v458
    %v475 = vrsqrt.pop %v459
    %v476 = vrsqrt.pop %v460
    %v477 = vrsqrt.pop %v461
    %v478 = vrsqrt.pop %v462
    %v479 = vrsqrt.pop %v463
    %v480 = vrsqrt.pop %v464
    %v481 = vrsqrt.pop %v465
    %v482 = vrsqrt.pop %v466
    %v483 = vrsqrt.pop %v467
    %v484 = vld [vmem:[#allocation7] sm:$0xff]
    %v485 = vld [vmem:[#allocation8] sm:$0xff]
    %v487 = vsel %vm131, %v115, 0
    %v490 = vsel %vm131, %v116, 0
    %v493 = vsel %vm131, %v117, 0
    %v496 = vsel %vm131, %v118, 0
    %v499 = vsel %vm131, %v119, 0
    %v502 = vsel %vm131, %v120, 0
    %v505 = vsel %vm131, %v121, 0
    %v508 = vsel %vm131, %v122, 0
    %v511 = vsel %vm131, %v123, 0
    %v514 = vsel %vm131, %v124, 0
    %v517 = vsel %vm131, %v125, 0
    %v520 = vsel %vm131, %v126, 0
    %v523 = vsel %vm131, %v127, 0
    %v526 = vsel %vm131, %v128, 0
    %v529 = vsel %vm131, %v129, 0
    %v532 = vsel %vm131, %v130, 0
    %534 = vmatprep.subr.mxu0 0.0
    %535 = vmatpush1.msra.mxu0 %v485
    %536 = vmatprep.subr.mxu0 0.0
    %537 = vmatpush1.msra.mxu0 0.0
    %538 = vmatprep.subr.mxu0 0.0
    %539 = vmatpush1.msra.mxu0 0.0
    %540 = vmatprep.subr.mxu0 0.0
    %541 = vmatpush1.msra.mxu0 0.0
    %542 = vmatprep.subr.mxu0 0.0
    %543 = vmatpush1.msra.mxu0 0.0
    %544 = vmatprep.subr.mxu0 0.0
    %545 = vmatpush1.msra.mxu0 0.0
    %546 = vmatprep.subr.mxu0 0.0
    %547 = vmatpush1.msra.mxu0 0.0
    %548 = vmatprep.subr.mxu0 0.0
    %549 = vmatpush1.msra.mxu0 0.0
    %550 = vmatprep.subr.mxu0 0.0
    %551 = vmatpush1.msra.mxu0 0.0
    %552 = vmatprep.subr.mxu0 0.0
    %553 = vmatpush1.msra.mxu0 0.0
    %554 = vmatprep.subr.mxu0 0.0
    %555 = vmatpush1.msra.mxu0 0.0
    %556 = vmatprep.subr.mxu0 0.0
    %557 = vmatpush1.msra.mxu0 0.0
    %558 = vmatprep.subr.mxu0 0.0
    %559 = vmatpush1.msra.mxu0 0.0
    %560 = vmatprep.subr.mxu0 0.0
    %561 = vmatpush1.msra.mxu0 0.0
    %562 = vmatprep.subr.mxu0 0.0
    %563 = vmatpush1.msra.mxu0 0.0
    %564 = vmatprep.subr.mxu0 0.0
    %565 = vmatpush1.msra.mxu0 0.0
    %566 = vmatprep.subr.mxu0 0.0
    %567 = vmatpush1.msra.mxu0 0.0
    %568 = vmatprep.subr.mxu0 0.0
    %569 = vmatpush1.msra.mxu0 0.0
    %570 = vmatprep.subr.mxu0 0.0
    %571 = vmatpush1.msra.mxu0 0.0
    %572 = vmatprep.subr.mxu0 0.0
    %573 = vmatpush1.msra.mxu0 0.0
    %574 = vmatprep.subr.mxu0 0.0
    %575 = vmatpush1.msra.mxu0 0.0
    %576 = vmatprep.subr.mxu0 0.0
    %577 = vmatpush1.msra.mxu0 0.0
    %578 = vmatprep.subr.mxu0 0.0
    %579 = vmatpush1.msra.mxu0 0.0
    %580 = vmatprep.subr.mxu0 0.0
    %581 = vmatpush1.msra.mxu0 0.0
    %582 = vmatprep.subr.mxu0 0.0
    %583 = vmatpush1.msra.mxu0 0.0
    %584 = vmatprep.subr.mxu0 0.0
    %585 = vmatpush1.msra.mxu0 0.0
    %586 = vmatprep.subr.mxu0 0.0
    %587 = vmatpush1.msra.mxu0 0.0
    %588 = vmatprep.subr.mxu0 0.0
    %589 = vmatpush1.msra.mxu0 0.0
    %590 = vmatprep.subr.mxu0 0.0
    %591 = vmatpush1.msra.mxu0 0.0
    %592 = vmatprep.subr.mxu0 0.0
    %593 = vmatpush1.msra.mxu0 0.0
    %594 = vmatprep.subr.mxu0 0.0
    %595 = vmatpush1.msra.mxu0 0.0
    %596 = vmatprep.subr.mxu0 0.0
    %597 = vmatpush1.msra.mxu0 0.0
    %598 = vmatprep.mubr.f32.mxu0 0.0
    %599 = vmatmul.mubr.f32.gmra.mrb[0].mxu0 %v487
    %v600 = vpop.f32.mrb[0].mxu0
    %v601 = vadd.f32 0.0, %v600
    %v602 = vpop.f32.mrb[0].mxu0
    %603 = vmatprep.mubr.f32.mxu0 0.0
    %604 = vmatmul.mubr.f32.gmra.mrb[0].mxu0 %v490
    %v605 = vpop.f32.mrb[0].mxu0
    %v606 = vadd.f32 0.0, %v605
    %v607 = vpop.f32.mrb[0].mxu0
    %608 = vmatprep.mubr.f32.mxu0 0.0
    %609 = vmatmul.mubr.f32.gmra.mrb[0].mxu0 %v493
    %v610 = vpop.f32.mrb[0].mxu0
    %v611 = vadd.f32 0.0, %v610
    %v612 = vpop.f32.mrb[0].mxu0
    %613 = vmatprep.mubr.f32.mxu0 0.0
    %614 = vmatmul.mubr.f32.gmra.mrb[0].mxu0 %v496
    %v615 = vpop.f32.mrb[0].mxu0
    %v616 = vadd.f32 0.0, %v615
    %v617 = vpop.f32.mrb[0].mxu0
    %618 = vmatprep.mubr.f32.mxu0 0.0
    %619 = vmatmul.mubr.f32.gmra.mrb[0].mxu0 %v499
    %v620 = vpop.f32.mrb[0].mxu0
    %v621 = vadd.f32 0.0, %v620
    %v622 = vpop.f32.mrb[0].mxu0
    %623 = vmatprep.mubr.f32.mxu0 0.0
    %624 = vmatmul.mubr.f32.gmra.mrb[0].mxu0 %v502
    %v625 = vpop.f32.mrb[0].mxu0
    %v626 = vadd.f32 0.0, %v625
    %v627 = vpop.f32.mrb[0].mxu0
    %628 = vmatprep.mubr.f32.mxu0 0.0
    %629 = vmatmul.mubr.f32.gmra.mrb[0].mxu0 %v505
    %v630 = vpop.f32.mrb[0].mxu0
    %v631 = vadd.f32 0.0, %v630
    %v632 = vpop.f32.mrb[0].mxu0
    %633 = vmatprep.mubr.f32.mxu0 0.0
    %634 = vmatmul.mubr.f32.gmra.mrb[0].mxu0 %v508
    %v635 = vpop.f32.mrb[0].mxu0
    %v636 = vadd.f32 0.0, %v635
    %v637 = vpop.f32.mrb[0].mxu0
    %638 = vmatprep.mubr.f32.mxu0 0.0
    %639 = vmatmul.mubr.f32.gmra.mrb[0].mxu0 %v511
    %v640 = vpop.f32.mrb[0].mxu0
    %v641 = vadd.f32 0.0, %v640
    %v642 = vpop.f32.mrb[0].mxu0
    %643 = vmatprep.mubr.f32.mxu0 0.0
    %644 = vmatmul.mubr.f32.gmra.mrb[0].mxu0 %v514
    %v645 = vpop.f32.mrb[0].mxu0
    %v646 = vadd.f32 0.0, %v645
    %v647 = vpop.f32.mrb[0].mxu0
    %648 = vmatprep.mubr.f32.mxu0 0.0
    %649 = vmatmul.mubr.f32.gmra.mrb[0].mxu0 %v517
    %v650 = vpop.f32.mrb[0].mxu0
    %v651 = vadd.f32 0.0, %v650
    %v652 = vpop.f32.mrb[0].mxu0
    %653 = vmatprep.mubr.f32.mxu0 0.0
    %654 = vmatmul.mubr.f32.gmra.mrb[0].mxu0 %v520
    %v655 = vpop.f32.mrb[0].mxu0
    %v656 = vadd.f32 0.0, %v655
    %v657 = vpop.f32.mrb[0].mxu0
    %658 = vmatprep.mubr.f32.mxu0 0.0
    %659 = vmatmul.mubr.f32.gmra.mrb[0].mxu0 %v523
    %v660 = vpop.f32.mrb[0].mxu0
    %v661 = vadd.f32 0.0, %v660
    %v662 = vpop.f32.mrb[0].mxu0
    %663 = vmatprep.mubr.f32.mxu0 0.0
    %664 = vmatmul.mubr.f32.gmra.mrb[0].mxu0 %v526
    %v665 = vpop.f32.mrb[0].mxu0
    %v666 = vadd.f32 0.0, %v665
    %v667 = vpop.f32.mrb[0].mxu0
    %668 = vmatprep.mubr.f32.mxu0 0.0
    %669 = vmatmul.mubr.f32.gmra.mrb[0].mxu0 %v529
    %v670 = vpop.f32.mrb[0].mxu0
    %v671 = vadd.f32 0.0, %v670
    %v672 = vpop.f32.mrb[0].mxu0
    %673 = vmatprep.mubr.f32.mxu0 0.0
    %674 = vmatmul.mubr.f32.gmra.mrb[0].mxu0 %v532
    %v675 = vpop.f32.mrb[0].mxu0
    %v676 = vadd.f32 0.0, %v675
    %v677 = vpop.f32.mrb[0].mxu0
    %678 = vdwg.mxu0
    %v680 = vsel %vm131, %v99, 0
    %v683 = vsel %vm131, %v100, 0
    %v686 = vsel %vm131, %v101, 0
    %v689 = vsel %vm131, %v102, 0
    %v692 = vsel %vm131, %v103, 0
    %v695 = vsel %vm131, %v104, 0
    %v698 = vsel %vm131, %v105, 0
    %v701 = vsel %vm131, %v106, 0
    %v704 = vsel %vm131, %v107, 0
    %v707 = vsel %vm131, %v108, 0
    %v710 = vsel %vm131, %v109, 0
    %v713 = vsel %vm131, %v110, 0
    %v716 = vsel %vm131, %v111, 0
    %v719 = vsel %vm131, %v112, 0
    %v722 = vsel %vm131, %v113, 0
    %v725 = vsel %vm131, %v114, 0
    %727 = vmatprep.subr.mxu0 0.0
    %728 = vmatpush1.msra.mxu0 %v484
    %729 = vmatprep.subr.mxu0 0.0
    %730 = vmatpush1.msra.mxu0 0.0
    %731 = vmatprep.subr.mxu0 0.0
    %732 = vmatpush1.msra.mxu0 0.0
    %733 = vmatprep.subr.mxu0 0.0
    %734 = vmatpush1.msra.mxu0 0.0
    %735 = vmatprep.subr.mxu0 0.0
    %736 = vmatpush1.msra.mxu0 0.0
    %737 = vmatprep.subr.mxu0 0.0
    %738 = vmatpush1.msra.mxu0 0.0
    %739 = vmatprep.subr.mxu0 0.0
    %740 = vmatpush1.msra.mxu0 0.0
    %741 = vmatprep.subr.mxu0 0.0
    %742 = vmatpush1.msra.mxu0 0.0
    %743 = vmatprep.subr.mxu0 0.0
    %744 = vmatpush1.msra.mxu0 0.0
    %745 = vmatprep.subr.mxu0 0.0
    %746 = vmatpush1.msra.mxu0 0.0
    %747 = vmatprep.subr.mxu0 0.0
    %748 = vmatpush1.msra.mxu0 0.0
    %749 = vmatprep.subr.mxu0 0.0
    %750 = vmatpush1.msra.mxu0 0.0
    %751 = vmatprep.subr.mxu0 0.0
    %752 = vmatpush1.msra.mxu0 0.0
    %753 = vmatprep.subr.mxu0 0.0
    %754 = vmatpush1.msra.mxu0 0.0
    %755 = vmatprep.subr.mxu0 0.0
    %756 = vmatpush1.msra.mxu0 0.0
    %757 = vmatprep.subr.mxu0 0.0
    %758 = vmatpush1.msra.mxu0 0.0
    %759 = vmatprep.subr.mxu0 0.0
    %760 = vmatpush1.msra.mxu0 0.0
    %761 = vmatprep.subr.mxu0 0.0
    %762 = vmatpush1.msra.mxu0 0.0
    %763 = vmatprep.subr.mxu0 0.0
    %764 = vmatpush1.msra.mxu0 0.0
    %765 = vmatprep.subr.mxu0 0.0
    %766 = vmatpush1.msra.mxu0 0.0
    %767 = vmatprep.subr.mxu0 0.0
    %768 = vmatpush1.msra.mxu0 0.0
    %769 = vmatprep.subr.mxu0 0.0
    %770 = vmatpush1.msra.mxu0 0.0
    %771 = vmatprep.subr.mxu0 0.0
    %772 = vmatpush1.msra.mxu0 0.0
    %773 = vmatprep.subr.mxu0 0.0
    %774 = vmatpush1.msra.mxu0 0.0
    %775 = vmatprep.subr.mxu0 0.0
    %776 = vmatpush1.msra.mxu0 0.0
    %777 = vmatprep.subr.mxu0 0.0
    %778 = vmatpush1.msra.mxu0 0.0
    %779 = vmatprep.subr.mxu0 0.0
    %780 = vmatpush1.msra.mxu0 0.0
    %781 = vmatprep.subr.mxu0 0.0
    %782 = vmatpush1.msra.mxu0 0.0
    %783 = vmatprep.subr.mxu0 0.0
    %784 = vmatpush1.msra.mxu0 0.0
    %785 = vmatprep.subr.mxu0 0.0
    %786 = vmatpush1.msra.mxu0 0.0
    %787 = vmatprep.subr.mxu0 0.0
    %788 = vmatpush1.msra.mxu0 0.0
    %789 = vmatprep.subr.mxu0 0.0
    %790 = vmatpush1.msra.mxu0 0.0
    %791 = vmatprep.mubr.f32.mxu0 0.0
    %792 = vmatmul.mubr.f32.gmra.mrb[0].mxu0 %v680
    %v793 = vpop.f32.mrb[0].mxu0
    %v794 = vadd.f32 %v601, %v793
    %v795 = vpop.f32.mrb[0].mxu0
    %796 = vmatprep.mubr.f32.mxu0 0.0
    %797 = vmatmul.mubr.f32.gmra.mrb[0].mxu0 %v683
    %v798 = vpop.f32.mrb[0].mxu0
    %v799 = vadd.f32 %v606, %v798
    %v800 = vpop.f32.mrb[0].mxu0
    %801 = vmatprep.mubr.f32.mxu0 0.0
    %802 = vmatmul.mubr.f32.gmra.mrb[0].mxu0 %v686
    %v803 = vpop.f32.mrb[0].mxu0
    %v804 = vadd.f32 %v611, %v803
    %v805 = vpop.f32.mrb[0].mxu0
    %806 = vmatprep.mubr.f32.mxu0 0.0
    %807 = vmatmul.mubr.f32.gmra.mrb[0].mxu0 %v689
    %v808 = vpop.f32.mrb[0].mxu0
    %v809 = vadd.f32 %v616, %v808
    %v810 = vpop.f32.mrb[0].mxu0
    %811 = vmatprep.mubr.f32.mxu0 0.0
    %812 = vmatmul.mubr.f32.gmra.mrb[0].mxu0 %v692
    %v813 = vpop.f32.mrb[0].mxu0
    %v814 = vadd.f32 %v621, %v813
    %v815 = vpop.f32.mrb[0].mxu0
    %816 = vmatprep.mubr.f32.mxu0 0.0
    %817 = vmatmul.mubr.f32.gmra.mrb[0].mxu0 %v695
    %v818 = vpop.f32.mrb[0].mxu0
    %v819 = vadd.f32 %v626, %v818
    %v820 = vpop.f32.mrb[0].mxu0
    %821 = vmatprep.mubr.f32.mxu0 0.0
    %822 = vmatmul.mubr.f32.gmra.mrb[0].mxu0 %v698
    %v823 = vpop.f32.mrb[0].mxu0
    %v824 = vadd.f32 %v631, %v823
    %v825 = vpop.f32.mrb[0].mxu0
    %826 = vmatprep.mubr.f32.mxu0 0.0
    %827 = vmatmul.mubr.f32.gmra.mrb[0].mxu0 %v701
    %v828 = vpop.f32.mrb[0].mxu0
    %v829 = vadd.f32 %v636, %v828
    %v830 = vpop.f32.mrb[0].mxu0
    %831 = vmatprep.mubr.f32.mxu0 0.0
    %832 = vmatmul.mubr.f32.gmra.mrb[0].mxu0 %v704
    %v833 = vpop.f32.mrb[0].mxu0
    %v834 = vadd.f32 %v641, %v833
    %v835 = vpop.f32.mrb[0].mxu0
    %836 = vmatprep.mubr.f32.mxu0 0.0
    %837 = vmatmul.mubr.f32.gmra.mrb[0].mxu0 %v707
    %v838 = vpop.f32.mrb[0].mxu0
    %v839 = vadd.f32 %v646, %v838
    %v840 = vpop.f32.mrb[0].mxu0
    %841 = vmatprep.mubr.f32.mxu0 0.0
    %842 = vmatmul.mubr.f32.gmra.mrb[0].mxu0 %v710
    %v843 = vpop.f32.mrb[0].mxu0
    %v844 = vadd.f32 %v651, %v843
    %v845 = vpop.f32.mrb[0].mxu0
    %846 = vmatprep.mubr.f32.mxu0 0.0
    %847 = vmatmul.mubr.f32.gmra.mrb[0].mxu0 %v713
    %v848 = vpop.f32.mrb[0].mxu0
    %v849 = vadd.f32 %v656, %v848
    %v850 = vpop.f32.mrb[0].mxu0
    %851 = vmatprep.mubr.f32.mxu0 0.0
    %852 = vmatmul.mubr.f32.gmra.mrb[0].mxu0 %v716
    %v853 = vpop.f32.mrb[0].mxu0
    %v854 = vadd.f32 %v661, %v853
    %v855 = vpop.f32.mrb[0].mxu0
    %856 = vmatprep.mubr.f32.mxu0 0.0
    %857 = vmatmul.mubr.f32.gmra.mrb[0].mxu0 %v719
    %v858 = vpop.f32.mrb[0].mxu0
    %v859 = vadd.f32 %v666, %v858
    %v860 = vpop.f32.mrb[0].mxu0
    %861 = vmatprep.mubr.f32.mxu0 0.0
    %862 = vmatmul.mubr.f32.gmra.mrb[0].mxu0 %v722
    %v863 = vpop.f32.mrb[0].mxu0
    %v864 = vadd.f32 %v671, %v863
    %v865 = vpop.f32.mrb[0].mxu0
    %866 = vmatprep.mubr.f32.mxu0 0.0
    %867 = vmatmul.mubr.f32.gmra.mrb[0].mxu0 %v725
    %v868 = vpop.f32.mrb[0].mxu0
    %v869 = vadd.f32 %v676, %v868
    %v870 = vpop.f32.mrb[0].mxu0
    %871 = vdwg.mxu0
    %v872 = vld [vmem:[#allocation10] sm:$0x1]
    %v874 = vlaneseq
    %v875 = vshrl.u32 %v874, 7
    %v876 = vsub.s32 0, %v875
    %v877 = vrot.slane %v872, %v876
    %v879 = vmul.f32 %v388, %v877
    %v880 = vmul.f32 %v389, %v877
    %v881 = vmul.f32 %v390, %v877
    %v882 = vmul.f32 %v391, %v877
    %v883 = vmul.f32 %v392, %v877
    %v884 = vmul.f32 %v393, %v877
    %v885 = vmul.f32 %v394, %v877
    %v886 = vmul.f32 %v395, %v877
    %v887 = vmul.f32 %v396, %v877
    %v888 = vmul.f32 %v397, %v877
    %v889 = vmul.f32 %v398, %v877
    %v890 = vmul.f32 %v399, %v877
    %v891 = vmul.f32 %v400, %v877
    %v892 = vmul.f32 %v401, %v877
    %v893 = vmul.f32 %v402, %v877
    %v894 = vmul.f32 %v403, %v877
    %v895 = vsub.f32 %v794, %v879
    %v896 = vsub.f32 %v799, %v880
    %v897 = vsub.f32 %v804, %v881
    %v898 = vsub.f32 %v809, %v882
    %v899 = vsub.f32 %v814, %v883
    %v900 = vsub.f32 %v819, %v884
    %v901 = vsub.f32 %v824, %v885
    %v902 = vsub.f32 %v829, %v886
    %v903 = vsub.f32 %v834, %v887
    %v904 = vsub.f32 %v839, %v888
    %v905 = vsub.f32 %v844, %v889
    %v906 = vsub.f32 %v849, %v890
    %v907 = vsub.f32 %v854, %v891
    %v908 = vsub.f32 %v859, %v892
    %v909 = vsub.f32 %v864, %v893
    %v910 = vsub.f32 %v869, %v894
    %v911 = vmul.f32 %v468, %v895
    %v912 = vmul.f32 %v469, %v896
    %v913 = vmul.f32 %v470, %v897
    %v914 = vmul.f32 %v471, %v898
    %v915 = vmul.f32 %v472, %v899
    %v916 = vmul.f32 %v473, %v900
    %v917 = vmul.f32 %v474, %v901
    %v918 = vmul.f32 %v475, %v902
    %v919 = vmul.f32 %v476, %v903
    %v920 = vmul.f32 %v477, %v904
    %v921 = vmul.f32 %v478, %v905
    %v922 = vmul.f32 %v479, %v906
    %v923 = vmul.f32 %v480, %v907
    %v924 = vmul.f32 %v481, %v908
    %v925 = vmul.f32 %v482, %v909
    %v926 = vmul.f32 %v483, %v910
    %v927 = vld [vmem:[#allocation11] sm:$0x1]
    %v929 = vlaneseq
    %v930 = vshrl.u32 %v929, 7
    %v931 = vsub.s32 0, %v930
    %v932 = vrot.slane %v927, %v931
    %v934 = vadd.f32 %v911, %v932
    %v935 = vadd.f32 %v912, %v932
    %v936 = vadd.f32 %v913, %v932
    %v937 = vadd.f32 %v914, %v932
    %v938 = vadd.f32 %v915, %v932
    %v939 = vadd.f32 %v916, %v932
    %v940 = vadd.f32 %v917, %v932
    %v941 = vadd.f32 %v918, %v932
    %v942 = vadd.f32 %v919, %v932
    %v943 = vadd.f32 %v920, %v932
    %v944 = vadd.f32 %v921, %v932
    %v945 = vadd.f32 %v922, %v932
    %v946 = vadd.f32 %v923, %v932
    %v947 = vadd.f32 %v924, %v932
    %v948 = vadd.f32 %v925, %v932
    %v949 = vadd.f32 %v926, %v932
    %950 = vst [vmem:[#allocation13] sm:$0xff] %v934
    %951 = vst [vmem:[#allocation13 + $0x8] sm:$0xff] %v935
    %952 = vst [vmem:[#allocation13 + $0x10] sm:$0xff] %v936
    %953 = vst [vmem:[#allocation13 + $0x18] sm:$0xff] %v937
    %954 = vst [vmem:[#allocation13 + $0x20] sm:$0xff] %v938
    %955 = vst [vmem:[#allocation13 + $0x28] sm:$0xff] %v939
    %956 = vst [vmem:[#allocation13 + $0x30] sm:$0xff] %v940
    %957 = vst [vmem:[#allocation13 + $0x38] sm:$0xff] %v941
    %958 = vst [vmem:[#allocation13 + $0x40] sm:$0xff] %v942
    %959 = vst [vmem:[#allocation13 + $0x48] sm:$0xff] %v943
    %960 = vst [vmem:[#allocation13 + $0x50] sm:$0xff] %v944
    %961 = vst [vmem:[#allocation13 + $0x58] sm:$0xff] %v945
    %962 = vst [vmem:[#allocation13 + $0x60] sm:$0xff] %v946
    %963 = vst [vmem:[#allocation13 + $0x68] sm:$0xff] %v947
    %964 = vst [vmem:[#allocation13 + $0x70] sm:$0xff] %v948
    %965 = vst [vmem:[#allocation13 + $0x78] sm:$0xff] %v949
    // Predicated region
    $region50: #{tpu_custom_call.1} parent=1 // pred_check
      _
    $region51: #{tpu_custom_call.1} parent=1 // pred_check_branch
      %967 = sbr.rel (0) target = $region53
    $region52: #{tpu_custom_call.1} parent=1 // pred_region
      %s969 = ssub.s32 2048, 2048
      %970 = vsyncadd [#allocation4], %s969
      %s971 = sshll.u32 [#allocation13], 4
      %s972 = int_to_ptr.vmem [resolvable:$true] %s971
      %977 = dma.vmem_to_hbm [thread:$0]  %s972, 2048, %s6, [#allocation4], 128, 128, 8
    $region53: #{tpu_custom_call.1} parent=1 // pred_fallthru
      _
    // Predicated region
    $region54: #{tpu_custom_call.1} parent=1 // pred_check
      _
    $region55: #{tpu_custom_call.1} parent=1 // pred_check_branch
      %979 = sbr.rel (0) target = $region57
    $region56: #{tpu_custom_call.1} parent=1 // pred_region
      %980 = dma.done [#allocation4], 2048
    $region57: #{tpu_custom_call.1} parent=1 // pred_fallthru
      _
    %981 = vsyncpa [#allocation3], 1
    %982 = vsyncpa [#allocation6], 1
    %983 = vsyncpa [#allocation9], 1
    %984 = vsyncpa [#allocation12], 1
    %985 = vsyncpa [#allocation4], 1

</llo_original>
